<compile_context>
chip_gen: v5e
topology: v5e:2x2
jax: 0.10.0
libtpu: 0.0.40
codegen_flags: <defaults>
</compile_context>

<pallas_src>
import functools

import jax
import jax.numpy as jnp
from jax.experimental import pallas as pl
from jax.experimental.pallas import tpu as pltpu


def _round_up(x, m):
    return (x + m - 1) // m * m


def _pick_tile(total, max_tile, multiple):
    """Tile size (multiple of `multiple`, capped at max_tile) and padded total."""
    tile = min(max_tile, _round_up(total, multiple))
    return tile, _round_up(total, tile)


# ----------------------------------------------------------------------------
# Phase 1: global average pool over the spatial axis (streaming reduction).
# ----------------------------------------------------------------------------
def pool_sum_kernel(x_ref, out_ref, *, inv_hw):
    # x_ref: (row_tile, hw_tile) f32; out_ref: (row_tile, 1) resident across axis 1
    k = pl.program_id(1)

    @pl.when(k == 0)
    def _():
        out_ref[...] = jnp.zeros_like(out_ref)

    out_ref[...] += jnp.sum(x_ref[...], axis=-1, keepdims=True)

    @pl.when(k == pl.num_programs(1) - 1)
    def _():
        out_ref[...] *= inv_hw


# ----------------------------------------------------------------------------
# Phase 2: gate MLP (the two 1x1 convs) on the pooled temporal diffs.  Tiny.
# ----------------------------------------------------------------------------
def gate_kernel(d1_ref, d2_ref, w1_ref, b1_ref, w2_ref, b2_ref, gate_ref):
    def mlp(d):
        h = jnp.dot(d, w1_ref[...], preferred_element_type=jnp.float32) + b1_ref[...]
        h = jnp.maximum(h, 0.0)
        o = jnp.dot(h, w2_ref[...], preferred_element_type=jnp.float32) + b2_ref[...]
        return jax.nn.sigmoid(o)

    gate_ref[...] = (mlp(d1_ref[...]) + mlp(d2_ref[...])) * 0.5


# ----------------------------------------------------------------------------
# Phase 3: streaming broadcast multiply   out = x_att * gate.
# ----------------------------------------------------------------------------
def scale_kernel(x_att_ref, gate_ref, out_ref):
    # x_att_ref/out_ref: (row_tile, hw_tile); gate_ref: (row_tile, 1)
    out_ref[...] = x_att_ref[...] * gate_ref[...]


# ----------------------------------------------------------------------------
# Wrapper
# ----------------------------------------------------------------------------
def tca_forward(x, x_att, w1, b1, w2, b2, frame):
    """x, x_att: (N, C, H, W) float32 (NCHW, matching the PyTorch module)."""
    N, C, H, W = x.shape
    assert N % frame == 0
    V = N // frame
    HW = H * W
    rows = N * C

    # Lane-dense 2-D layout: (N*C, HW).  Tiles aligned to (8, 128).
    hw_tile, hw_pad = _pick_tile(HW, 1024, 128)
    row_tile, row_pad = _pick_tile(rows, 256, 8)

    def pad2d(a):
        a = a.reshape(rows, HW)
        if (row_pad, hw_pad) != (rows, HW):
            a = jnp.pad(a, ((0, row_pad - rows), (0, hw_pad - HW)))
        return a

    x2d = pad2d(x)
    xa2d = pad2d(x_att)

    stream_params = pltpu.CompilerParams(
        dimension_semantics=("parallel", "arbitrary"),
        vmem_limit_bytes=32 * 1024 * 1024)

    # ---- Phase 1: pooled mean over the spatial axis ----
    pooled_col = pl.pallas_call(
        functools.partial(pool_sum_kernel, inv_hw=1.0 / HW),
        out_shape=jax.ShapeDtypeStruct((row_pad, 1), jnp.float32),
        grid=(row_pad // row_tile, hw_pad // hw_tile),
        in_specs=[pl.BlockSpec((row_tile, hw_tile), lambda i, k: (i, k))],
        out_specs=pl.BlockSpec((row_tile, 1), lambda i, k: (i, 0)),
        compiler_params=stream_params,
        cost_estimate=pl.CostEstimate(
            flops=row_pad * hw_pad, transcendentals=0,
            bytes_accessed=(row_pad * hw_pad + row_pad) * 4),
    )(x2d)

    pooled = pooled_col[:rows].reshape(N, C)

    # ---- Temporal roll / diff on the tiny pooled tensor (wrapper-side) ----
    pt = pooled.reshape(V, frame, C)
    d1 = (pt - jnp.roll(pt, 1, axis=1)).reshape(N, C)
    d2 = ((pt - jnp.roll(pt, 2, axis=1)) * 0.5).reshape(N, C)

    # ---- Phase 2: gate MLP micro-kernel (whole tiny tensors in VMEM) ----
    vmem = pl.BlockSpec(memory_space=pltpu.MemorySpace.VMEM)
    gate = pl.pallas_call(
        gate_kernel,
        out_shape=jax.ShapeDtypeStruct((N, C), jnp.float32),
        in_specs=[vmem] * 6,
        out_specs=vmem,
    )(d1, d2, w1, b1, w2, b2)

    gate_col = gate.reshape(rows, 1)
    if row_pad != rows:
        gate_col = jnp.pad(gate_col, ((0, row_pad - rows), (0, 0)))

    # ---- Phase 3: streaming multiply (both axes parallel for megacore) ----
    out2d = pl.pallas_call(
        scale_kernel,
        out_shape=jax.ShapeDtypeStruct((row_pad, hw_pad), jnp.float32),
        grid=(row_pad // row_tile, hw_pad // hw_tile),
        in_specs=[pl.BlockSpec((row_tile, hw_tile), lambda i, j: (i, j)),
                  pl.BlockSpec((row_tile, 1), lambda i, j: (i, 0))],
        out_specs=pl.BlockSpec((row_tile, hw_tile), lambda i, j: (i, j)),
        compiler_params=pltpu.CompilerParams(
            dimension_semantics=("parallel", "parallel"),
            vmem_limit_bytes=32 * 1024 * 1024),
        cost_estimate=pl.CostEstimate(
            flops=row_pad * hw_pad, transcendentals=0,
            bytes_accessed=(2 * row_pad * hw_pad + row_pad) * 4),
    )(xa2d, gate_col)

    return out2d[:rows, :HW].reshape(N, C, H, W)


# ----------------------------------------------------------------------------
# Pure-JAX reference mirroring the PyTorch forward.
# ----------------------------------------------------------------------------
def tca_reference(x, x_att, w1, b1, w2, b2, frame):
    N, C, H, W = x.shape
    V = N // frame
    pooled = x.mean(axis=(2, 3))                                  # (N, C)
    xt = pooled.reshape(V, frame, C)
    xt1 = jnp.concatenate([xt[:, -1:], xt[:, :-1]], axis=1)
    xt2 = jnp.concatenate([xt[:, -2:], xt[:, :-2]], axis=1)
    d1 = (xt - xt1).reshape(N, C)
    d2 = ((xt - xt2) * 0.5).reshape(N, C)

    def tca_diff(d):
        h = jnp.maximum(d @ w1 + b1, 0.0)
        return jax.nn.sigmoid(h @ w2 + b2)

    gate = (tca_diff(d1) + tca_diff(d2)) * 0.5
    return x_att * gate[:, :, None, None]


if __name__ == "__main__":
    dim, frame = 16, 4
    V, H, W = 2, 16, 16
    N = V * frame                    # batch = videos * frames

    key = jax.random.PRNGKey(0)
    kx, ka, kw1, kb1, kw2, kb2 = jax.random.split(key, 6)

    x = jax.random.normal(kx, (N, dim, H, W), jnp.float32)
    x_att = jax.random.normal(ka, (N, dim, H, W), jnp.float32)

    # 1x1-conv params (torch weight (out, in, 1, 1) stored transposed (in, out)).
    w1 = jax.random.uniform(kw1, (dim, dim * 4), jnp.float32, -0.25, 0.25)
    b1 = jax.random.uniform(kb1, (1, dim * 4), jnp.float32, -0.25, 0.25)
    w2 = jax.random.uniform(kw2, (dim * 4, dim), jnp.float32, -0.125, 0.125)
    b2 = jax.random.uniform(kb2, (1, dim), jnp.float32, -0.125, 0.125)

    out = jax.block_until_ready(tca_forward(x, x_att, w1, b1, w2, b2, frame))
    ref = jax.block_until_ready(tca_reference(x, x_att, w1, b1, w2, b2, frame))

    assert out.shape == (N, dim, H, W)
    assert jnp.allclose(out, ref, atol=1e-5, rtol=1e-5), \
        f"max abs err {jnp.max(jnp.abs(out - ref))}"
    print("KERNEL_OK")
</pallas_src>

<mosaic_0001>
module attributes {stable_mosaic.version = 11 : i64} {
  func.func @pool_sum_kernel(%arg0: i32, %arg1: i32, %arg2: memref<128x256xf32, #tpu.memory_space<vmem>>, %arg3: memref<128x1xf32, #tpu.memory_space<vmem>>) attributes {dimension_semantics = [#tpu.dimension_semantics<parallel>, #tpu.dimension_semantics<arbitrary>], iteration_bounds = array<i64: 1, 1>, scalar_prefetch = 0 : i64, scratch_operands = 0 : i64, tpu.core_type = #tpu.core_type<tc>, window_params = [{transform_indices = @transform_0, window_bounds = array<i64: 128, 256>}, {transform_indices = @transform_1, window_bounds = array<i64: 128, 1>}]} {
    %c0_i32 = arith.constant 0 : i32
    %0 = arith.cmpi eq, %arg1, %c0_i32 : i32
    %1 = arith.extui %0 : i1 to i32
    %c0_i32_0 = arith.constant 0 : i32
    %2 = arith.cmpi ne, %1, %c0_i32_0 : i32
    scf.if %2 {
      %cst_8 = arith.constant 0.000000e+00 : f32
      %12 = vector.broadcast %cst_8 : f32 to vector<128x1xf32>
      %c0_9 = arith.constant 0 : index
      %c0_10 = arith.constant 0 : index
      %13 = vector.load %arg3[%c0_9, %c0_10] : memref<128x1xf32, #tpu.memory_space<vmem>>, vector<128x1xf32>
      tpu.vector_store %arg3[%c0_9, %c0_10], %12 {strides = array<i32>} : memref<128x1xf32, #tpu.memory_space<vmem>>, vector<128x1xf32>,
    } else {
    }
    %c0 = arith.constant 0 : index
    %c0_1 = arith.constant 0 : index
    %3 = vector.load %arg3[%c0, %c0_1] : memref<128x1xf32, #tpu.memory_space<vmem>>, vector<128x1xf32>
    %c0_2 = arith.constant 0 : index
    %c0_3 = arith.constant 0 : index
    %4 = vector.load %arg2[%c0_2, %c0_3] : memref<128x256xf32, #tpu.memory_space<vmem>>, vector<128x256xf32>
    %cst = arith.constant dense<0.000000e+00> : vector<128xf32>
    %5 = vector.multi_reduction <add>, %4, %cst [1] : vector<128x256xf32> to vector<128xf32>
    %6 = vector.shape_cast %5 : vector<128xf32> to vector<128x1xf32>
    %7 = arith.addf %3, %6 : vector<128x1xf32>
    %c0_4 = arith.constant 0 : index
    %c0_5 = arith.constant 0 : index
    %8 = vector.load %arg3[%c0_4, %c0_5] : memref<128x1xf32, #tpu.memory_space<vmem>>, vector<128x1xf32>
    tpu.vector_store %arg3[%c0_4, %c0_5], %7 {strides = array<i32>} : memref<128x1xf32, #tpu.memory_space<vmem>>, vector<128x1xf32>,
    %c0_i32_6 = arith.constant 0 : i32
    %9 = arith.cmpi eq, %arg1, %c0_i32_6 : i32
    %10 = arith.extui %9 : i1 to i32
    %c0_i32_7 = arith.constant 0 : i32
    %11 = arith.cmpi ne, %10, %c0_i32_7 : i32
    scf.if %11 {
      %c0_8 = arith.constant 0 : index
      %c0_9 = arith.constant 0 : index
      %12 = vector.load %arg3[%c0_8, %c0_9] : memref<128x1xf32, #tpu.memory_space<vmem>>, vector<128x1xf32>
      %cst_10 = arith.constant 3.906250e-03 : f32
      %13 = vector.broadcast %cst_10 : f32 to vector<128x1xf32>
      %14 = arith.mulf %12, %13 : vector<128x1xf32>
      %c0_11 = arith.constant 0 : index
      %c0_12 = arith.constant 0 : index
      %15 = vector.load %arg3[%c0_11, %c0_12] : memref<128x1xf32, #tpu.memory_space<vmem>>, vector<128x1xf32>
      tpu.vector_store %arg3[%c0_11, %c0_12], %14 {strides = array<i32>} : memref<128x1xf32, #tpu.memory_space<vmem>>, vector<128x1xf32>,
    } else {
    }
    return
  }
  func.func @transform_0(%arg0: i32, %arg1: i32) -> (i32, i32) {
    %c0_i32 = arith.constant 0 : i32
    return %arg0, %arg1 : i32, i32
  }
  func.func @transform_1(%arg0: i32, %arg1: i32) -> (i32, i32) {
    %c0_i32 = arith.constant 0 : i32
    %c0_i32_0 = arith.constant 0 : i32
    return %arg0, %c0_i32 : i32, i32
  }
}

</mosaic_0001>

<llo_original>
// kernel: tpu_custom_call.1
$region0: #{tpu_custom_call.1}
  #allocation0 [shape = 'u32[]', space=smem, size = 0x4, offset = 0x4, fixed_abs, tag = 'smem constant byte address 0x4 - core index']
  #allocation1 [shape = 'u32[72,128]{1,0:T(1,128)}', space=vmem, size = 0x9000, scoped, tag = 'internal scratch']
  %s0 = inlined_call_operand.hbm [shape: f32[128,256], index: 0, kind: input, shape index: {}]
  %s1 = inlined_call_operand.vmem [shape: f32[128,1], index: 1, kind: output, shape index: {}]
  %s2 = sld [smem:[#allocation0]]
  $region26: #{tpu_custom_call.1} parent=0
    _
  %s4 = ssub.s32 1, %s2
  %s5 = scalar_select 0, %s4, %s2
  $region1: #{tpu_custom_call.1} parent=0
    #allocation2 [shape = 'u8[131072]{0}', space=vmem, size = 0x20000, scoped, tag = 'input window, operand 0, single buffered']
    #allocation3 [shape = 's32[1]{0}', space=sflag, size = 0x4, scoped, tag = 'scoped memory for tpu_custom_call.1']
    %6 = vsyncpa [#allocation3], 0
    // Predicated region
    $region2: #{tpu_custom_call.1} parent=1 // pred_check
      _
    $region3: #{tpu_custom_call.1} parent=1 // pred_check_branch
      %8 = sbr.rel (0) target = $region5
    $region4: #{tpu_custom_call.1} parent=1 // pred_region
      %10 = vsyncadd [#allocation3], 0
      %s11 = sshll.u32 %s0, 4
      %s12 = int_to_ptr.hbm [resolvable:$true] %s11
      %s13 = sshll.u32 [#allocation2], 4
      %s14 = int_to_ptr.vmem [resolvable:$true] %s13
      %19 = dma.hbm_to_vmem [thread:$0]  %s12, 4096, %s14, [#allocation3], 256, 256, 16
    $region5: #{tpu_custom_call.1} parent=1 // pred_fallthru
      _
    // Predicated region
    $region6: #{tpu_custom_call.1} parent=1 // pred_check
      _
    $region7: #{tpu_custom_call.1} parent=1 // pred_check_branch
      %21 = sbr.rel (0) target = $region9
    $region8: #{tpu_custom_call.1} parent=1 // pred_region
      %23 = dma.done [#allocation3], 4096
    $region9: #{tpu_custom_call.1} parent=1 // pred_fallthru
      _
    %p24 = scmp.eq.s32.totalorder 0, 0
    // Predicated region
    $region10: #{tpu_custom_call.1} parent=1 // pred_check
      %p25 = pneg %p24
    $region11: #{tpu_custom_call.1} parent=1 // pred_check_branch
      %27 = sbr.rel (%p25) target = $region13
    $region12: #{tpu_custom_call.1} parent=1 // pred_region
      %vm28 = vcmask 7168
      %29 = vst.msk [vmem:[%s1] sm:$0xff] %vm28, 0.0
      %30 = vst.msk [vmem:[%s1 + $0x8] sm:$0xff] %vm28, 0.0
      %31 = vst.msk [vmem:[%s1 + $0x10] sm:$0xff] %vm28, 0.0
      %32 = vst.msk [vmem:[%s1 + $0x18] sm:$0xff] %vm28, 0.0
      %33 = vst.msk [vmem:[%s1 + $0x20] sm:$0xff] %vm28, 0.0
      %34 = vst.msk [vmem:[%s1 + $0x28] sm:$0xff] %vm28, 0.0
      %35 = vst.msk [vmem:[%s1 + $0x30] sm:$0xff] %vm28, 0.0
      %36 = vst.msk [vmem:[%s1 + $0x38] sm:$0xff] %vm28, 0.0
      %37 = vst.msk [vmem:[%s1 + $0x40] sm:$0xff] %vm28, 0.0
      %38 = vst.msk [vmem:[%s1 + $0x48] sm:$0xff] %vm28, 0.0
      %39 = vst.msk [vmem:[%s1 + $0x50] sm:$0xff] %vm28, 0.0
      %40 = vst.msk [vmem:[%s1 + $0x58] sm:$0xff] %vm28, 0.0
      %41 = vst.msk [vmem:[%s1 + $0x60] sm:$0xff] %vm28, 0.0
      %42 = vst.msk [vmem:[%s1 + $0x68] sm:$0xff] %vm28, 0.0
      %43 = vst.msk [vmem:[%s1 + $0x70] sm:$0xff] %vm28, 0.0
      %44 = vst.msk [vmem:[%s1 + $0x78] sm:$0xff] %vm28, 0.0
    $region13: #{tpu_custom_call.1} parent=1 // pred_fallthru
      _
    %v45 = vld [vmem:[%s1] sm:$0xff]
    %v46 = vld [vmem:[%s1 + $0x8] sm:$0xff]
    %v47 = vld [vmem:[%s1 + $0x10] sm:$0xff]
    %v48 = vld [vmem:[%s1 + $0x18] sm:$0xff]
    %v49 = vld [vmem:[%s1 + $0x20] sm:$0xff]
    %v50 = vld [vmem:[%s1 + $0x28] sm:$0xff]
    %v51 = vld [vmem:[%s1 + $0x30] sm:$0xff]
    %v52 = vld [vmem:[%s1 + $0x38] sm:$0xff]
    %v53 = vld [vmem:[%s1 + $0x40] sm:$0xff]
    %v54 = vld [vmem:[%s1 + $0x48] sm:$0xff]
    %v55 = vld [vmem:[%s1 + $0x50] sm:$0xff]
    %v56 = vld [vmem:[%s1 + $0x58] sm:$0xff]
    %v57 = vld [vmem:[%s1 + $0x60] sm:$0xff]
    %v58 = vld [vmem:[%s1 + $0x68] sm:$0xff]
    %v59 = vld [vmem:[%s1 + $0x70] sm:$0xff]
    %v60 = vld [vmem:[%s1 + $0x78] sm:$0xff]
    %v61 = vld [vmem:[#allocation2] sm:$0xff]
    %v62 = vld [vmem:[#allocation2 + $0x8] sm:$0xff]
    %v63 = vld [vmem:[#allocation2 + $0x10] sm:$0xff]
    %v64 = vld [vmem:[#allocation2 + $0x18] sm:$0xff]
    %v65 = vld [vmem:[#allocation2 + $0x20] sm:$0xff]
    %v66 = vld [vmem:[#allocation2 + $0x28] sm:$0xff]
    %v67 = vld [vmem:[#allocation2 + $0x30] sm:$0xff]
    %v68 = vld [vmem:[#allocation2 + $0x38] sm:$0xff]
    %v69 = vld [vmem:[#allocation2 + $0x40] sm:$0xff]
    %v70 = vld [vmem:[#allocation2 + $0x48] sm:$0xff]
    %v71 = vld [vmem:[#allocation2 + $0x50] sm:$0xff]
    %v72 = vld [vmem:[#allocation2 + $0x58] sm:$0xff]
    %v73 = vld [vmem:[#allocation2 + $0x60] sm:$0xff]
    %v74 = vld [vmem:[#allocation2 + $0x68] sm:$0xff]
    %v75 = vld [vmem:[#allocation2 + $0x70] sm:$0xff]
    %v76 = vld [vmem:[#allocation2 + $0x78] sm:$0xff]
    %v77 = vld [vmem:[#allocation2 + $0x80] sm:$0xff]
    %v78 = vld [vmem:[#allocation2 + $0x88] sm:$0xff]
    %v79 = vld [vmem:[#allocation2 + $0x90] sm:$0xff]
    %v80 = vld [vmem:[#allocation2 + $0x98] sm:$0xff]
    %v81 = vld [vmem:[#allocation2 + $0xa0] sm:$0xff]
    %v82 = vld [vmem:[#allocation2 + $0xa8] sm:$0xff]
    %v83 = vld [vmem:[#allocation2 + $0xb0] sm:$0xff]
    %v84 = vld [vmem:[#allocation2 + $0xb8] sm:$0xff]
    %v85 = vld [vmem:[#allocation2 + $0xc0] sm:$0xff]
    %v86 = vld [vmem:[#allocation2 + $0xc8] sm:$0xff]
    %v87 = vld [vmem:[#allocation2 + $0xd0] sm:$0xff]
    %v88 = vld [vmem:[#allocation2 + $0xd8] sm:$0xff]
    %v89 = vld [vmem:[#allocation2 + $0xe0] sm:$0xff]
    %v90 = vld [vmem:[#allocation2 + $0xe8] sm:$0xff]
    %v91 = vld [vmem:[#allocation2 + $0xf0] sm:$0xff]
    %v92 = vld [vmem:[#allocation2 + $0xf8] sm:$0xff]
    %v93 = vadd.f32 %v61, %v62
    %94 = vadd.xlane.f32.xlu0 %v93
    %v95 = vpop.xlane.xlu0 %94
    %v96 = vadd.f32 %v63, %v64
    %97 = vadd.xlane.f32.xlu0 %v96
    %v98 = vpop.xlane.xlu0 %97
    %v99 = vadd.f32 %v65, %v66
    %100 = vadd.xlane.f32.xlu0 %v99
    %v101 = vpop.xlane.xlu0 %100
    %v102 = vadd.f32 %v67, %v68
    %103 = vadd.xlane.f32.xlu0 %v102
    %v104 = vpop.xlane.xlu0 %103
    %v105 = vadd.f32 %v69, %v70
    %106 = vadd.xlane.f32.xlu0 %v105
    %v107 = vpop.xlane.xlu0 %106
    %v108 = vadd.f32 %v71, %v72
    %109 = vadd.xlane.f32.xlu0 %v108
    %v110 = vpop.xlane.xlu0 %109
    %v111 = vadd.f32 %v73, %v74
    %112 = vadd.xlane.f32.xlu0 %v111
    %v113 = vpop.xlane.xlu0 %112
    %v114 = vadd.f32 %v75, %v76
    %115 = vadd.xlane.f32.xlu0 %v114
    %v116 = vpop.xlane.xlu0 %115
    %v117 = vadd.f32 %v77, %v78
    %118 = vadd.xlane.f32.xlu0 %v117
    %v119 = vpop.xlane.xlu0 %118
    %v120 = vadd.f32 %v79, %v80
    %121 = vadd.xlane.f32.xlu0 %v120
    %v122 = vpop.xlane.xlu0 %121
    %v123 = vadd.f32 %v81, %v82
    %124 = vadd.xlane.f32.xlu0 %v123
    %v125 = vpop.xlane.xlu0 %124
    %v126 = vadd.f32 %v83, %v84
    %127 = vadd.xlane.f32.xlu0 %v126
    %v128 = vpop.xlane.xlu0 %127
    %v129 = vadd.f32 %v85, %v86
    %130 = vadd.xlane.f32.xlu0 %v129
    %v131 = vpop.xlane.xlu0 %130
    %v132 = vadd.f32 %v87, %v88
    %133 = vadd.xlane.f32.xlu0 %v132
    %v134 = vpop.xlane.xlu0 %133
    %v135 = vadd.f32 %v89, %v90
    %136 = vadd.xlane.f32.xlu0 %v135
    %v137 = vpop.xlane.xlu0 %136
    %v138 = vadd.f32 %v91, %v92
    %139 = vadd.xlane.f32.xlu0 %v138
    %v140 = vpop.xlane.xlu0 %139
    %v141 = vadd.f32 %v45, %v95
    %v142 = vadd.f32 %v46, %v98
    %v143 = vadd.f32 %v47, %v101
    %v144 = vadd.f32 %v48, %v104
    %v145 = vadd.f32 %v49, %v107
    %v146 = vadd.f32 %v50, %v110
    %v147 = vadd.f32 %v51, %v113
    %v148 = vadd.f32 %v52, %v116
    %v149 = vadd.f32 %v53, %v119
    %v150 = vadd.f32 %v54, %v122
    %v151 = vadd.f32 %v55, %v125
    %v152 = vadd.f32 %v56, %v128
    %v153 = vadd.f32 %v57, %v131
    %v154 = vadd.f32 %v58, %v134
    %v155 = vadd.f32 %v59, %v137
    %v156 = vadd.f32 %v60, %v140
    %vm157 = vcmask 7168
    %158 = vst.msk [vmem:[%s1] sm:$0xff] %vm157, %v141
    %159 = vst.msk [vmem:[%s1 + $0x8] sm:$0xff] %vm157, %v142
    %160 = vst.msk [vmem:[%s1 + $0x10] sm:$0xff] %vm157, %v143
    %161 = vst.msk [vmem:[%s1 + $0x18] sm:$0xff] %vm157, %v144
    %162 = vst.msk [vmem:[%s1 + $0x20] sm:$0xff] %vm157, %v145
    %163 = vst.msk [vmem:[%s1 + $0x28] sm:$0xff] %vm157, %v146
    %164 = vst.msk [vmem:[%s1 + $0x30] sm:$0xff] %vm157, %v147
    %165 = vst.msk [vmem:[%s1 + $0x38] sm:$0xff] %vm157, %v148
    %166 = vst.msk [vmem:[%s1 + $0x40] sm:$0xff] %vm157, %v149
    %167 = vst.msk [vmem:[%s1 + $0x48] sm:$0xff] %vm157, %v150
    %168 = vst.msk [vmem:[%s1 + $0x50] sm:$0xff] %vm157, %v151
    %169 = vst.msk [vmem:[%s1 + $0x58] sm:$0xff] %vm157, %v152
    %170 = vst.msk [vmem:[%s1 + $0x60] sm:$0xff] %vm157, %v153
    %171 = vst.msk [vmem:[%s1 + $0x68] sm:$0xff] %vm157, %v154
    %172 = vst.msk [vmem:[%s1 + $0x70] sm:$0xff] %vm157, %v155
    %173 = vst.msk [vmem:[%s1 + $0x78] sm:$0xff] %vm157, %v156
    // Predicated region
    $region14: #{tpu_custom_call.1} parent=1 // pred_check
      %p174 = pneg %p24
    $region15: #{tpu_custom_call.1} parent=1 // pred_check_branch
      %176 = sbr.rel (%p174) target = $region17
    $region16: #{tpu_custom_call.1} parent=1 // pred_region
      %v177 = vld [vmem:[%s1] sm:$0xff]
      %v178 = vld [vmem:[%s1 + $0x8] sm:$0xff]
      %v179 = vld [vmem:[%s1 + $0x10] sm:$0xff]
      %v180 = vld [vmem:[%s1 + $0x18] sm:$0xff]
      %v181 = vld [vmem:[%s1 + $0x20] sm:$0xff]
      %v182 = vld [vmem:[%s1 + $0x28] sm:$0xff]
      %v183 = vld [vmem:[%s1 + $0x30] sm:$0xff]
      %v184 = vld [vmem:[%s1 + $0x38] sm:$0xff]
      %v185 = vld [vmem:[%s1 + $0x40] sm:$0xff]
      %v186 = vld [vmem:[%s1 + $0x48] sm:$0xff]
      %v187 = vld [vmem:[%s1 + $0x50] sm:$0xff]
      %v188 = vld [vmem:[%s1 + $0x58] sm:$0xff]
      %v189 = vld [vmem:[%s1 + $0x60] sm:$0xff]
      %v190 = vld [vmem:[%s1 + $0x68] sm:$0xff]
      %v191 = vld [vmem:[%s1 + $0x70] sm:$0xff]
      %v192 = vld [vmem:[%s1 + $0x78] sm:$0xff]
      %v193 = vmul.f32 %v177, 0.00390625
      %v194 = vmul.f32 %v178, 0.00390625
      %v195 = vmul.f32 %v179, 0.00390625
      %v196 = vmul.f32 %v180, 0.00390625
      %v197 = vmul.f32 %v181, 0.00390625
      %v198 = vmul.f32 %v182, 0.00390625
      %v199 = vmul.f32 %v183, 0.00390625
      %v200 = vmul.f32 %v184, 0.00390625
      %v201 = vmul.f32 %v185, 0.00390625
      %v202 = vmul.f32 %v186, 0.00390625
      %v203 = vmul.f32 %v187, 0.00390625
      %v204 = vmul.f32 %v188, 0.00390625
      %v205 = vmul.f32 %v189, 0.00390625
      %v206 = vmul.f32 %v190, 0.00390625
      %v207 = vmul.f32 %v191, 0.00390625
      %v208 = vmul.f32 %v192, 0.00390625
      %209 = vst.msk [vmem:[%s1] sm:$0xff] %vm157, %v193
      %210 = vst.msk [vmem:[%s1 + $0x8] sm:$0xff] %vm157, %v194
      %211 = vst.msk [vmem:[%s1 + $0x10] sm:$0xff] %vm157, %v195
      %212 = vst.msk [vmem:[%s1 + $0x18] sm:$0xff] %vm157, %v196
      %213 = vst.msk [vmem:[%s1 + $0x20] sm:$0xff] %vm157, %v197
      %214 = vst.msk [vmem:[%s1 + $0x28] sm:$0xff] %vm157, %v198
      %215 = vst.msk [vmem:[%s1 + $0x30] sm:$0xff] %vm157, %v199
      %216 = vst.msk [vmem:[%s1 + $0x38] sm:$0xff] %vm157, %v200
      %217 = vst.msk [vmem:[%s1 + $0x40] sm:$0xff] %vm157, %v201
      %218 = vst.msk [vmem:[%s1 + $0x48] sm:$0xff] %vm157, %v202
      %219 = vst.msk [vmem:[%s1 + $0x50] sm:$0xff] %vm157, %v203
      %220 = vst.msk [vmem:[%s1 + $0x58] sm:$0xff] %vm157, %v204
      %221 = vst.msk [vmem:[%s1 + $0x60] sm:$0xff] %vm157, %v205
      %222 = vst.msk [vmem:[%s1 + $0x68] sm:$0xff] %vm157, %v206
      %223 = vst.msk [vmem:[%s1 + $0x70] sm:$0xff] %vm157, %v207
      %224 = vst.msk [vmem:[%s1 + $0x78] sm:$0xff] %vm157, %v208
    $region17: #{tpu_custom_call.1} parent=1 // pred_fallthru
      _
    // Predicated region
    $region18: #{tpu_custom_call.1} parent=1 // pred_check
      _
    $region19: #{tpu_custom_call.1} parent=1 // pred_check_branch
      %226 = sbr.rel (0) target = $region21
    $region20: #{tpu_custom_call.1} parent=1 // pred_region
      _
    $region21: #{tpu_custom_call.1} parent=1 // pred_fallthru
      _
    // Predicated region
    $region22: #{tpu_custom_call.1} parent=1 // pred_check
      _
    $region23: #{tpu_custom_call.1} parent=1 // pred_check_branch
      %228 = sbr.rel (0) target = $region25
    $region24: #{tpu_custom_call.1} parent=1 // pred_region
      _
    $region25: #{tpu_custom_call.1} parent=1 // pred_fallthru
      _
    %229 = vsyncpa [#allocation3], 1

</llo_original>
